<compile_context>
chip_gen: v7x
topology: tpu7x:2x2x1
jax: 0.10.0
libtpu: 0.0.40
codegen_flags: <defaults>
</compile_context>

<pallas_src>
import functools

import jax
import jax.numpy as jnp
from jax import lax
from jax.experimental import pallas as pl
from jax.experimental.pallas import tpu as pltpu

_LANES = 128
_VMEM_CAP = 56 << 20          # headroom under v7x's 64 MiB/TC physical VMEM


def _round_up(a, b):
    return (a + b - 1) // b * b


def _conv_prenorm_residual_kernel(x_ref, w_ref, gamma_ref, beta_ref, o_ref, *, eps):
    # x_ref:     (C, T)  activation tile: channels on sublanes, spatial on lanes
    # w_ref:     (C, C)  1x1 conv weight (out_c, in_c), resident
    # gamma_ref: (C, 1)  LayerNorm2d weight (f32), resident
    # beta_ref:  (C, 1)  LayerNorm2d bias   (f32), resident
    # o_ref:     (C, T)
    x = x_ref[...].astype(jnp.float32)

    # Channel LayerNorm = cross-sublane reduction; two-pass variance (no cancellation).
    mu = jnp.mean(x, axis=0, keepdims=True)             # (1, T)
    xc = x - mu
    var = jnp.mean(xc * xc, axis=0, keepdims=True)      # (1, T), >= 0 by construction
    y = xc * lax.rsqrt(var + eps)
    y = y * gamma_ref[...] + beta_ref[...]

    # fn(y): 1x1 pointwise conv on the MXU, contraction over channels, f32 accumulation.
    out = jnp.dot(w_ref[...], y.astype(w_ref.dtype),
                  preferred_element_type=jnp.float32)

    # Residual: re-read x from VMEM instead of keeping the full f32 upcast live across
    # the matmul (avoids spilling a tile's worth of vregs around the MXU call).
    o_ref[...] = (out + x_ref[...].astype(jnp.float32)).astype(o_ref.dtype)


def _vmem_need_bytes(c, t, x_item, p_item):
    cs = _round_up(c, 8)                     # sublane padding
    cl = _round_up(c, _LANES)                # lane padding (weight / params only)
    tl = _round_up(t, _LANES)
    stream = 2 * 2 * cs * tl * x_item        # double-buffered x-in + out tiles
    resident = 2 * cs * cl * p_item + 2 * cs * _LANES * 4   # weight (<=2 bufs) + gamma/beta
    interm = 3 * cs * tl * 4                 # f32 intermediates / compiler temp margin
    return stream + resident + interm + (2 << 20)


def _choose_tile_hw(hw, n, c, x_item, p_item, tile_hw):
    if hw <= _LANES:
        return hw                                          # single full-width tile
    t = max(_LANES, _round_up(min(int(tile_hw), hw), _LANES))
    if t >= hw:
        t = hw                                             # full dim: legal, no masking
    elif n == 1:
        # v7x has 2 TensorCores; keep >= 2 grid steps when the batch axis is trivial.
        t = min(t, max(_LANES, _round_up(pl.cdiv(hw, 2), _LANES)))
    # Shrink the tile (never clamp vmem_limit below the real need) until it fits the cap.
    while _vmem_need_bytes(c, t, x_item, p_item) > _VMEM_CAP and t > 2 * _LANES:
        t = max(2 * _LANES, _round_up(t // 2, _LANES))
    return t


def conv_prenorm_residual(x_nchw, gamma, beta, w, *, eps=1e-6, tile_hw=1024,
                          param_dtype=None):
    """x_nchw: (N, C, H, W). gamma/beta: (C,) LayerNorm2d params. w: (C, C) 1x1 conv
    weight (out_c, in_c) for the representative `fn`. Returns (N, C, H, W)."""
    N, C, H, W = x_nchw.shape
    dtype = x_nchw.dtype
    if param_dtype is None:
        # MXU operands in bf16 (bf16-native MXUs, halves resident weight VMEM);
        # accumulation stays f32 via preferred_element_type.
        param_dtype = jnp.bfloat16

    HW = H * W
    x_item = jnp.dtype(dtype).itemsize
    p_item = jnp.dtype(param_dtype).itemsize
    t = _choose_tile_hw(HW, N, C, x_item, p_item, tile_hw)
    grid = (N, pl.cdiv(HW, t))

    # Free, metadata-only view: no transpose / pad passes over HBM.
    x3 = x_nchw.reshape(N, C, HW)
    gamma_p = gamma.astype(jnp.float32).reshape(C, 1)
    beta_p = beta.astype(jnp.float32).reshape(C, 1)
    w_p = w.astype(param_dtype)

    vmem_limit = int(min(max(_vmem_need_bytes(C, t, x_item, p_item), 24 << 20),
                         _VMEM_CAP))

    kernel = functools.partial(_conv_prenorm_residual_kernel, eps=float(eps))

    def build(single_buffer_resident):
        res_kw = dict(pipeline_mode=pl.Buffered(1)) if single_buffer_resident else {}
        return pl.pallas_call(
            kernel,
            out_shape=jax.ShapeDtypeStruct((N, C, HW), dtype),
            grid_spec=pltpu.PrefetchScalarGridSpec(
                num_scalar_prefetch=0,
                grid=grid,
                in_specs=[
                    pl.BlockSpec((None, C, t), lambda n, j: (n, 0, j)),   # x (streamed)
                    pl.BlockSpec((C, C), lambda n, j: (0, 0), **res_kw),  # W (resident)
                    pl.BlockSpec((C, 1), lambda n, j: (0, 0), **res_kw),  # gamma
                    pl.BlockSpec((C, 1), lambda n, j: (0, 0), **res_kw),  # beta
                ],
                out_specs=pl.BlockSpec((None, C, t), lambda n, j: (n, 0, j)),
            ),
            compiler_params=pltpu.CompilerParams(
                dimension_semantics=("parallel", "parallel"),
                vmem_limit_bytes=vmem_limit,
            ),
        )

    try:
        out3 = build(True)(x3, w_p, gamma_p, beta_p)
    except Exception:
        # Fallback for jax versions without pipeline_mode single-buffering support.
        out3 = build(False)(x3, w_p, gamma_p, beta_p)

    return out3.reshape(N, C, H, W)


def _reference(x_nchw, gamma, beta, w, eps):
    # Pure-JAX reference: LayerNorm2d over channels + 1x1 conv `fn` + residual.
    xf = x_nchw.astype(jnp.float32)
    mu = xf.mean(1, keepdims=True)
    var = ((xf - mu) ** 2).mean(1, keepdims=True)
    y = (xf - mu) / jnp.sqrt(var + eps)
    y = gamma.reshape(1, -1, 1, 1) * y + beta.reshape(1, -1, 1, 1)
    out = jnp.einsum('oi,nihw->nohw', w.astype(jnp.float32), y,
                     precision=lax.Precision.HIGHEST)
    return (out + xf).astype(x_nchw.dtype)


if __name__ == "__main__":
    key = jax.random.PRNGKey(0)
    kx, kg, kb, kw = jax.random.split(key, 4)

    N, C, H, W = 2, 4, 16, 16
    x = jax.random.normal(kx, (N, C, H, W), dtype=jnp.float32)
    gamma = 1.0 + 0.1 * jax.random.normal(kg, (C,), dtype=jnp.float32)
    beta = 0.1 * jax.random.normal(kb, (C,), dtype=jnp.float32)
    w = 0.1 * jax.random.normal(kw, (C, C), dtype=jnp.float32)   # representative `fn`

    ref = _reference(x, gamma, beta, w, 1e-6)

    # Full-precision params: tight check against the f32 reference.
    out_f32 = conv_prenorm_residual(x, gamma, beta, w, eps=1e-6,
                                    param_dtype=jnp.float32)
    out_f32 = jax.block_until_ready(out_f32)
    assert out_f32.shape == x.shape and out_f32.dtype == x.dtype
    assert jnp.allclose(out_f32, ref, atol=5e-3, rtol=5e-3), \
        float(jnp.max(jnp.abs(out_f32 - ref)))

    # Default path (bf16 MXU operands, f32 accumulation): looser tolerance.
    out_bf = conv_prenorm_residual(x, gamma, beta, w, eps=1e-6)
    out_bf = jax.block_until_ready(out_bf)
    assert out_bf.shape == x.shape and out_bf.dtype == x.dtype
    assert jnp.allclose(out_bf, ref, atol=2e-2, rtol=2e-2), \
        float(jnp.max(jnp.abs(out_bf - ref)))

    # Ragged trailing lane tile + multi-step HW grid (12*12 = 144 lanes, tile_hw = 128).
    x2 = jax.random.normal(kx, (1, C, 12, 12), dtype=jnp.float32)
    ref2 = _reference(x2, gamma, beta, w, 1e-6)
    out2 = conv_prenorm_residual(x2, gamma, beta, w, eps=1e-6, tile_hw=128,
                                 param_dtype=jnp.float32)
    out2 = jax.block_until_ready(out2)
    assert jnp.allclose(out2, ref2, atol=5e-3, rtol=5e-3), \
        float(jnp.max(jnp.abs(out2 - ref2)))

    print("KERNEL_OK")
</pallas_src>

<mosaic_0001>
module attributes {stable_mosaic.version = 11 : i64} {
  func.func @_conv_prenorm_residual_kernel(%arg0: i32, %arg1: i32, %arg2: memref<1x4x256xf32, #tpu.memory_space<vmem>>, %arg3: memref<4x4xf32, #tpu.memory_space<vmem>>, %arg4: memref<4x1xf32, #tpu.memory_space<vmem>>, %arg5: memref<4x1xf32, #tpu.memory_space<vmem>>, %arg6: memref<1x4x256xf32, #tpu.memory_space<vmem>>) attributes {dimension_semantics = [#tpu.dimension_semantics<parallel>, #tpu.dimension_semantics<parallel>], iteration_bounds = array<i64: 2, 1>, scalar_prefetch = 0 : i64, scratch_operands = 0 : i64, tpu.core_type = #tpu.core_type<tc>, window_params = [{transform_indices = @transform_0, window_bounds = array<i64: 1, 4, 256>}, {pipeline_mode = #tpu.pipeline_mode<synchronous>, transform_indices = @transform_1, window_bounds = array<i64: 4, 4>}, {pipeline_mode = #tpu.pipeline_mode<synchronous>, transform_indices = @transform_2, window_bounds = array<i64: 4, 1>}, {pipeline_mode = #tpu.pipeline_mode<synchronous>, transform_indices = @transform_3, window_bounds = array<i64: 4, 1>}, {transform_indices = @transform_4, window_bounds = array<i64: 1, 4, 256>}]} {
    %c0 = arith.constant 0 : index
    %c0_0 = arith.constant 0 : index
    %c0_1 = arith.constant 0 : index
    %0 = vector.load %arg2[%c0, %c0_0, %c0_1] : memref<1x4x256xf32, #tpu.memory_space<vmem>>, vector<1x4x256xf32>
    %1 = vector.shape_cast %0 : vector<1x4x256xf32> to vector<4x256xf32>
    %cst = arith.constant dense<0.000000e+00> : vector<256xf32>
    %2 = vector.multi_reduction <add>, %1, %cst [0] : vector<4x256xf32> to vector<256xf32>
    %3 = vector.shape_cast %2 : vector<256xf32> to vector<1x256xf32>
    %cst_2 = arith.constant 4.000000e+00 : f32
    %4 = vector.broadcast %cst_2 : f32 to vector<1x256xf32>
    %5 = arith.divf %3, %4 : vector<1x256xf32>
    %6 = vector.broadcast %5 : vector<1x256xf32> to vector<4x256xf32>
    %7 = arith.subf %1, %6 : vector<4x256xf32>
    %8 = arith.mulf %7, %7 : vector<4x256xf32>
    %cst_3 = arith.constant dense<0.000000e+00> : vector<256xf32>
    %9 = vector.multi_reduction <add>, %8, %cst_3 [0] : vector<4x256xf32> to vector<256xf32>
    %10 = vector.shape_cast %9 : vector<256xf32> to vector<1x256xf32>
    %cst_4 = arith.constant 4.000000e+00 : f32
    %11 = vector.broadcast %cst_4 : f32 to vector<1x256xf32>
    %12 = arith.divf %10, %11 : vector<1x256xf32>
    %cst_5 = arith.constant 9.99999997E-7 : f32
    %13 = vector.broadcast %cst_5 : f32 to vector<1x256xf32>
    %14 = arith.addf %12, %13 : vector<1x256xf32>
    %15 = math.rsqrt %14 : vector<1x256xf32>
    %16 = vector.broadcast %15 : vector<1x256xf32> to vector<4x256xf32>
    %17 = arith.mulf %7, %16 : vector<4x256xf32>
    %c0_6 = arith.constant 0 : index
    %c0_7 = arith.constant 0 : index
    %18 = vector.load %arg4[%c0_6, %c0_7] : memref<4x1xf32, #tpu.memory_space<vmem>>, vector<4x1xf32>
    %19 = vector.broadcast %18 : vector<4x1xf32> to vector<4x256xf32>
    %20 = arith.mulf %17, %19 : vector<4x256xf32>
    %c0_8 = arith.constant 0 : index
    %c0_9 = arith.constant 0 : index
    %21 = vector.load %arg5[%c0_8, %c0_9] : memref<4x1xf32, #tpu.memory_space<vmem>>, vector<4x1xf32>
    %22 = vector.broadcast %21 : vector<4x1xf32> to vector<4x256xf32>
    %23 = arith.addf %20, %22 : vector<4x256xf32>
    %c0_10 = arith.constant 0 : index
    %c0_11 = arith.constant 0 : index
    %24 = vector.load %arg3[%c0_10, %c0_11] : memref<4x4xf32, #tpu.memory_space<vmem>>, vector<4x4xf32>
    %cst_12 = arith.constant dense<0.000000e+00> : vector<4x256xf32>
    %25 = tpu.matmul %24, %23, %cst_12 {dimension_numbers = #tpu.dot_dimension_numbers<[1], [0], [0], [1], [0, 0, 1, 1], [], []>} : vector<4x4xf32>, vector<4x256xf32>, vector<4x256xf32> -> vector<4x256xf32>
    %c0_13 = arith.constant 0 : index
    %c0_14 = arith.constant 0 : index
    %c0_15 = arith.constant 0 : index
    %26 = vector.load %arg2[%c0_13, %c0_14, %c0_15] : memref<1x4x256xf32, #tpu.memory_space<vmem>>, vector<1x4x256xf32>
    %27 = vector.shape_cast %26 : vector<1x4x256xf32> to vector<4x256xf32>
    %28 = arith.addf %25, %27 : vector<4x256xf32>
    %c0_16 = arith.constant 0 : index
    %c0_17 = arith.constant 0 : index
    %c0_18 = arith.constant 0 : index
    %29 = vector.load %arg6[%c0_16, %c0_17, %c0_18] : memref<1x4x256xf32, #tpu.memory_space<vmem>>, vector<1x4x256xf32>
    %30 = vector.shape_cast %29 : vector<1x4x256xf32> to vector<4x256xf32>
    %31 = vector.shape_cast %28 : vector<4x256xf32> to vector<1x4x256xf32>
    tpu.vector_store %arg6[%c0_16, %c0_17, %c0_18], %31 {strides = array<i32>} : memref<1x4x256xf32, #tpu.memory_space<vmem>>, vector<1x4x256xf32>,
    return
  }
  func.func @transform_0(%arg0: i32, %arg1: i32) -> (i32, i32, i32) {
    %c0_i32 = arith.constant 0 : i32
    %c0_i32_0 = arith.constant 0 : i32
    return %arg0, %c0_i32, %arg1 : i32, i32, i32
  }
  func.func @transform_1(%arg0: i32, %arg1: i32) -> (i32, i32) {
    %c0_i32 = arith.constant 0 : i32
    %c0_i32_0 = arith.constant 0 : i32
    %c0_i32_1 = arith.constant 0 : i32
    return %c0_i32, %c0_i32_0 : i32, i32
  }
  func.func @transform_2(%arg0: i32, %arg1: i32) -> (i32, i32) {
    %c0_i32 = arith.constant 0 : i32
    %c0_i32_0 = arith.constant 0 : i32
    %c0_i32_1 = arith.constant 0 : i32
    return %c0_i32, %c0_i32_0 : i32, i32
  }
  func.func @transform_3(%arg0: i32, %arg1: i32) -> (i32, i32) {
    %c0_i32 = arith.constant 0 : i32
    %c0_i32_0 = arith.constant 0 : i32
    %c0_i32_1 = arith.constant 0 : i32
    return %c0_i32, %c0_i32_0 : i32, i32
  }
  func.func @transform_4(%arg0: i32, %arg1: i32) -> (i32, i32, i32) {
    %c0_i32 = arith.constant 0 : i32
    %c0_i32_0 = arith.constant 0 : i32
    return %arg0, %c0_i32, %arg1 : i32, i32, i32
  }
}

module attributes {stable_mosaic.version = 11 : i64} {
  func.func @_conv_prenorm_residual_kernel(%arg0: i32, %arg1: i32, %arg2: memref<1x4x256xf32, #tpu.memory_space<vmem>>, %arg3: memref<4x4xf32, #tpu.memory_space<vmem>>, %arg4: memref<4x1xf32, #tpu.memory_space<vmem>>, %arg5: memref<4x1xf32, #tpu.memory_space<vmem>>, %arg6: memref<1x4x256xf32, #tpu.memory_space<vmem>>) attributes {dimension_semantics = [#tpu.dimension_semantics<parallel>, #tpu.dimension_semantics<parallel>], iteration_bounds = array<i64: 2, 1>, scalar_prefetch = 0 : i64, scratch_operands = 0 : i64, tpu.core_type = #tpu.core_type<tc>, window_params = [{transform_indices = @transform_0, window_bounds = array<i64: 1, 4, 256>}, {pipeline_mode = #tpu.pipeline_mode<synchronous>, transform_indices = @transform_1, window_bounds = array<i64: 4, 4>}, {pipeline_mode = #tpu.pipeline_mode<synchronous>, transform_indices = @transform_2, window_bounds = array<i64: 4, 1>}, {pipeline_mode = #tpu.pipeline_mode<synchronous>, transform_indices = @transform_3, window_bounds = array<i64: 4, 1>}, {transform_indices = @transform_4, window_bounds = array<i64: 1, 4, 256>}]} {
    %c0 = arith.constant 0 : index
    %c0_0 = arith.constant 0 : index
    %c0_1 = arith.constant 0 : index
    %0 = vector.load %arg2[%c0, %c0_0, %c0_1] : memref<1x4x256xf32, #tpu.memory_space<vmem>>, vector<1x4x256xf32>
    %1 = vector.shape_cast %0 : vector<1x4x256xf32> to vector<4x256xf32>
    %cst = arith.constant dense<0.000000e+00> : vector<256xf32>
    %2 = vector.multi_reduction <add>, %1, %cst [0] : vector<4x256xf32> to vector<256xf32>
    %3 = vector.shape_cast %2 : vector<256xf32> to vector<1x256xf32>
    %cst_2 = arith.constant 4.000000e+00 : f32
    %4 = vector.broadcast %cst_2 : f32 to vector<1x256xf32>
    %5 = arith.divf %3, %4 : vector<1x256xf32>
    %6 = vector.broadcast %5 : vector<1x256xf32> to vector<4x256xf32>
    %7 = arith.subf %1, %6 : vector<4x256xf32>
    %8 = arith.mulf %7, %7 : vector<4x256xf32>
    %cst_3 = arith.constant dense<0.000000e+00> : vector<256xf32>
    %9 = vector.multi_reduction <add>, %8, %cst_3 [0] : vector<4x256xf32> to vector<256xf32>
    %10 = vector.shape_cast %9 : vector<256xf32> to vector<1x256xf32>
    %cst_4 = arith.constant 4.000000e+00 : f32
    %11 = vector.broadcast %cst_4 : f32 to vector<1x256xf32>
    %12 = arith.divf %10, %11 : vector<1x256xf32>
    %cst_5 = arith.constant 9.99999997E-7 : f32
    %13 = vector.broadcast %cst_5 : f32 to vector<1x256xf32>
    %14 = arith.addf %12, %13 : vector<1x256xf32>
    %15 = math.rsqrt %14 : vector<1x256xf32>
    %16 = vector.broadcast %15 : vector<1x256xf32> to vector<4x256xf32>
    %17 = arith.mulf %7, %16 : vector<4x256xf32>
    %c0_6 = arith.constant 0 : index
    %c0_7 = arith.constant 0 : index
    %18 = vector.load %arg4[%c0_6, %c0_7] : memref<4x1xf32, #tpu.memory_space<vmem>>, vector<4x1xf32>
    %19 = vector.broadcast %18 : vector<4x1xf32> to vector<4x256xf32>
    %20 = arith.mulf %17, %19 : vector<4x256xf32>
    %c0_8 = arith.constant 0 : index
    %c0_9 = arith.constant 0 : index
    %21 = vector.load %arg5[%c0_8, %c0_9] : memref<4x1xf32, #tpu.memory_space<vmem>>, vector<4x1xf32>
    %22 = vector.broadcast %21 : vector<4x1xf32> to vector<4x256xf32>
    %23 = arith.addf %20, %22 : vector<4x256xf32>
    %c0_10 = arith.constant 0 : index
    %c0_11 = arith.constant 0 : index
    %24 = vector.load %arg3[%c0_10, %c0_11] : memref<4x4xf32, #tpu.memory_space<vmem>>, vector<4x4xf32>
    %cst_12 = arith.constant dense<0.000000e+00> : vector<4x256xf32>
    %25 = tpu.matmul %24, %23, %cst_12 {dimension_numbers = #tpu.dot_dimension_numbers<[1], [0], [0], [1], [0, 0, 1, 1], [], []>} : vector<4x4xf32>, vector<4x256xf32>, vector<4x256xf32> -> vector<4x256xf32>
    %c0_13 = arith.constant 0 : index
    %c0_14 = arith.constant 0 : index
    %c0_15 = arith.constant 0 : index
    %26 = vector.load %arg2[%c0_13, %c0_14, %c0_15] : memref<1x4x256xf32, #tpu.memory_space<vmem>>, vector<1x4x256xf32>
    %27 = vector.shape_cast %26 : vector<1x4x256xf32> to vector<4x256xf32>
    %28 = arith.addf %25, %27 : vector<4x256xf32>
    %c0_16 = arith.constant 0 : index
    %c0_17 = arith.constant 0 : index
    %c0_18 = arith.constant 0 : index
    %29 = vector.load %arg6[%c0_16, %c0_17, %c0_18] : memref<1x4x256xf32, #tpu.memory_space<vmem>>, vector<1x4x256xf32>
    %30 = vector.shape_cast %29 : vector<1x4x256xf32> to vector<4x256xf32>
    %31 = vector.shape_cast %28 : vector<4x256xf32> to vector<1x4x256xf32>
    tpu.vector_store %arg6[%c0_16, %c0_17, %c0_18], %31 {strides = array<i32>} : memref<1x4x256xf32, #tpu.memory_space<vmem>>, vector<1x4x256xf32>,
    return
  }
  func.func @transform_0(%arg0: i32, %arg1: i32) -> (i32, i32, i32) {
    %c0_i32 = arith.constant 0 : i32
    %c0_i32_0 = arith.constant 0 : i32
    return %arg0, %c0_i32, %arg1 : i32, i32, i32
  }
  func.func @transform_1(%arg0: i32, %arg1: i32) -> (i32, i32) {
    %c0_i32 = arith.constant 0 : i32
    %c0_i32_0 = arith.constant 0 : i32
    %c0_i32_1 = arith.constant 0 : i32
    return %c0_i32, %c0_i32_0 : i32, i32
  }
  func.func @transform_2(%arg0: i32, %arg1: i32) -> (i32, i32) {
    %c0_i32 = arith.constant 0 : i32
    %c0_i32_0 = arith.constant 0 : i32
    %c0_i32_1 = arith.constant 0 : i32
    return %c0_i32, %c0_i32_0 : i32, i32
  }
  func.func @transform_3(%arg0: i32, %arg1: i32) -> (i32, i32) {
    %c0_i32 = arith.constant 0 : i32
    %c0_i32_0 = arith.constant 0 : i32
    %c0_i32_1 = arith.constant 0 : i32
    return %c0_i32, %c0_i32_0 : i32, i32
  }
  func.func @transform_4(%arg0: i32, %arg1: i32) -> (i32, i32, i32) {
    %c0_i32 = arith.constant 0 : i32
    %c0_i32_0 = arith.constant 0 : i32
    return %arg0, %c0_i32, %arg1 : i32, i32, i32
  }
}

</mosaic_0001>

<llo_original>
// kernel: tpu_custom_call.1
$region0: #{tpu_custom_call.1}
  #allocation0 [shape = 'u32[]', space=smem, size = 0x4, offset = 0x4, fixed_abs, tag = 'smem constant byte address 0x4 - core index']
  #allocation1 [shape = 'u32[144,128]{1,0:T(1,128)}', space=vmem, size = 0x12000, scoped, tag = 'internal scratch']
  %s0 = inlined_call_operand.hbm [shape: f32[2,4,256], index: 0, kind: input, shape index: {}]
  %s1 = inlined_call_operand.vmem [shape: f32[4,4], index: 1, kind: input, shape index: {}]
  %s2 = inlined_call_operand.vmem [shape: f32[4,1], index: 2, kind: input, shape index: {}]
  %s3 = inlined_call_operand.vmem [shape: f32[4,1], index: 3, kind: input, shape index: {}]
  %s4 = inlined_call_operand.hbm [shape: f32[2,4,256], index: 4, kind: output, shape index: {}]
  %s5 = sld [smem:[#allocation0]]
  $region53: #{tpu_custom_call.1} parent=0
    _
  %s7 = ssub.s32 1, %s5
  %s8 = scalar_select 0, %s7, %s5
  $region1: #{tpu_custom_call.1} parent=0
    #allocation2 [shape = 'u8[8192]{0}', space=vmem, size = 0x2000, scoped, tag = 'input window, operand 0']
    #allocation3 [shape = 's32[2]{0}', space=sflag, size = 0x8, scoped, tag = 'scoped memory for tpu_custom_call.1']
    #allocation4 [shape = 's32[2]{0}', space=sflag, size = 0x8, scoped, tag = 'scoped memory for tpu_custom_call.1']
    #allocation5 [shape = 'u8[8192]{0}', space=vmem, size = 0x2000, scoped, tag = 'output window, operand 0']
    %9 = vsyncpa [#allocation3], 0
    %s10 = scalar_lea.sflag [#allocation3], 1
    %11 = vsyncpa %s10, 0
    %12 = vsyncpa [#allocation4], 0
    %s13 = scalar_lea.sflag [#allocation4], 1
    %14 = vsyncpa %s13, 0
    loop: start=0, step=1, limit=4
    $region2: #{tpu_custom_call.1} parent=1 // loop_pre_header
      _
    $region3: #{tpu_custom_call.1} parent=1 // loop_header
      %s16 = sphi 0, %s20
      %p17 = scmp.ge.s32.totalorder %s16, 4
      %s23 = sphi 0, %s35
      %s24 = sphi 0, %s31
      %s25 = sphi 0, %s23
      %s26 = sphi 0, %s24
      %s27 = sphi 0, %s25
      %s28 = sphi 0, %s26
      %s40 = sphi 0, %s42
      %s43 = sphi 0, %s40
      %s44 = sphi 0, %s43
      %s60 = sphi 0, %s44
      %s64 = sphi 0, %s64
      %s66 = sphi 0, %s64
      %s67 = sphi 0, %s66
      %s81 = sphi 0, %s67
      %s85 = sphi 0, %s85
      %s87 = sphi 0, %s85
      %s88 = sphi 0, %s87
      %s102 = sphi 0, %s88
      %s106 = sphi 0, %s106
      %s108 = sphi 0, %s106
      %s109 = sphi 0, %s108
      %s123 = sphi 0, %s109
      %s131 = sphi 0, %s133
      %s134 = sphi 0, %s131
      %s135 = sphi 0, %s134
      %s151 = sphi 0, %s135
    $region4: #{tpu_custom_call.1} parent=1 // loop_header_branch
      %19 = sbr.rel (%p17) target = $region8
    $region5: #{tpu_custom_call.1} parent=1 // loop_body
      %s21 = ssub.s32 %s16, 1
      %s22 = ssub.s32 %s16, 2
      %s29 = sadd.s32 1, %s24
      %p30 = scmp.ge.s32.totalorder %s29, 1
      %s31 = scalar_select %p30, 0, %s29
      %s32 = sadd.s32 1, %s23
      %s33 = scalar_select %p30, %s32, %s23
      %p34 = scmp.ge.s32.totalorder %s33, 2
      %s35 = scalar_select %p34, 0, %s33
      %s36 = ssub.s32 %s23, %s35
      %s37 = ssub.s32 %s24, %s31
      %s38 = sor.u32 %s36, %s37
      %p39 = scmp.eq.s32.totalorder %s38, 0
      %s41 = sadd.s32 %s40, 1
      %s42 = scalar_select %p39, %s40, %s41
      %p45 = pneg %p39
      %p46 = scmp.eq.s32.totalorder %s16, 1
      %p47 = por %p45, %p46
      %p48 = scmp.ne.s32.totalorder %s40, %s43
      %p49 = scmp.eq.s32.totalorder %s16, 0
      %p50 = por %p48, %p49
      %p51 = scmp.ne.s32.totalorder %s40, %s43
      %p52 = scmp.eq.s32.totalorder %s21, 1
      %p53 = por %p51, %p52
      %p54 = scmp.ne.s32.totalorder %s43, %s44
      %p55 = scmp.eq.s32.totalorder %s21, 0
      %p56 = por %p54, %p55
      %p57 = scmp.ne.s32.totalorder %s43, %s44
      %p58 = scmp.eq.s32.totalorder %s22, 1
      %p59 = por %p57, %p58
      %p61 = scmp.ne.s32.totalorder %s44, %s60
      %p62 = scmp.eq.s32.totalorder %s22, 0
      %p63 = por %p61, %p62
      %s65 = sadd.s32 %s64, 1
      %p68 = scmp.eq.s32.totalorder %s16, 1
      %p69 = scmp.ne.s32.totalorder %s64, %s66
      %p70 = scmp.eq.s32.totalorder %s16, 0
      %p71 = por %p69, %p70
      %p72 = scmp.ne.s32.totalorder %s64, %s66
      %p73 = scmp.eq.s32.totalorder %s21, 1
      %p74 = por %p72, %p73
      %p75 = scmp.ne.s32.totalorder %s66, %s67
      %p76 = scmp.eq.s32.totalorder %s21, 0
      %p77 = por %p75, %p76
      %p78 = scmp.ne.s32.totalorder %s66, %s67
      %p79 = scmp.eq.s32.totalorder %s22, 1
      %p80 = por %p78, %p79
      %p82 = scmp.ne.s32.totalorder %s67, %s81
      %p83 = scmp.eq.s32.totalorder %s22, 0
      %p84 = por %p82, %p83
      %s86 = sadd.s32 %s85, 1
      %p89 = scmp.eq.s32.totalorder %s16, 1
      %p90 = scmp.ne.s32.totalorder %s85, %s87
      %p91 = scmp.eq.s32.totalorder %s16, 0
      %p92 = por %p90, %p91
      %p93 = scmp.ne.s32.totalorder %s85, %s87
      %p94 = scmp.eq.s32.totalorder %s21, 1
      %p95 = por %p93, %p94
      %p96 = scmp.ne.s32.totalorder %s87, %s88
      %p97 = scmp.eq.s32.totalorder %s21, 0
      %p98 = por %p96, %p97
      %p99 = scmp.ne.s32.totalorder %s87, %s88
      %p100 = scmp.eq.s32.totalorder %s22, 1
      %p101 = por %p99, %p100
      %p103 = scmp.ne.s32.totalorder %s88, %s102
      %p104 = scmp.eq.s32.totalorder %s22, 0
      %p105 = por %p103, %p104
      %s107 = sadd.s32 %s106, 1
      %p110 = scmp.eq.s32.totalorder %s16, 1
      %p111 = scmp.ne.s32.totalorder %s106, %s108
      %p112 = scmp.eq.s32.totalorder %s16, 0
      %p113 = por %p111, %p112
      %p114 = scmp.ne.s32.totalorder %s106, %s108
      %p115 = scmp.eq.s32.totalorder %s21, 1
      %p116 = por %p114, %p115
      %p117 = scmp.ne.s32.totalorder %s108, %s109
      %p118 = scmp.eq.s32.totalorder %s21, 0
      %p119 = por %p117, %p118
      %p120 = scmp.ne.s32.totalorder %s108, %s109
      %p121 = scmp.eq.s32.totalorder %s22, 1
      %p122 = por %p120, %p121
      %p124 = scmp.ne.s32.totalorder %s109, %s123
      %p125 = scmp.eq.s32.totalorder %s22, 0
      %p126 = por %p124, %p125
      %s127 = ssub.s32 %s23, %s35
      %s128 = ssub.s32 %s24, %s31
      %s129 = sor.u32 %s127, %s128
      %p130 = scmp.eq.s32.totalorder %s129, 0
      %s132 = sadd.s32 %s131, 1
      %s133 = scalar_select %p130, %s131, %s132
      %p136 = pneg %p130
      %p137 = scmp.eq.s32.totalorder %s16, 1
      %p138 = por %p136, %p137
      %p139 = scmp.ne.s32.totalorder %s131, %s134
      %p140 = scmp.eq.s32.totalorder %s16, 0
      %p141 = por %p139, %p140
      %p142 = scmp.ne.s32.totalorder %s131, %s134
      %p143 = scmp.eq.s32.totalorder %s21, 1
      %p144 = por %p142, %p143
      %p145 = scmp.ne.s32.totalorder %s134, %s135
      %p146 = scmp.eq.s32.totalorder %s21, 0
      %p147 = por %p145, %p146
      %p148 = scmp.ne.s32.totalorder %s134, %s135
      %p149 = scmp.eq.s32.totalorder %s22, 1
      %p150 = por %p148, %p149
      %p152 = scmp.ne.s32.totalorder %s135, %s151
      %p153 = scmp.eq.s32.totalorder %s22, 0
      %p154 = por %p152, %p153
      %p155 = scmp.le.s32.totalorder 1, %s16
      %p156 = scmp.lt.s32.totalorder %s16, 3
      %p157 = pnand %p155, %p156
      %p158 = pneg %p157
      // Predicated region
      $region9: #{tpu_custom_call.1} parent=5 // pred_check
        _
      $region10: #{tpu_custom_call.1} parent=5 // pred_check_branch
        %160 = sbr.rel (%p157) target = $region12
      $region11: #{tpu_custom_call.1} parent=5 // pred_region
        %s161 = ssub.s32 %s16, 1
        // Predicated region
        $region13: #{tpu_custom_call.1} parent=11 // pred_check
          %p162 = pneg %p77
        $region14: #{tpu_custom_call.1} parent=11 // pred_check_branch
          %164 = sbr.rel (%p162) target = $region16
        $region15: #{tpu_custom_call.1} parent=11 // pred_region
          _
        $region16: #{tpu_custom_call.1} parent=11 // pred_fallthru
          _
        // Predicated region
        $region17: #{tpu_custom_call.1} parent=11 // pred_check
          %p165 = pneg %p98
        $region18: #{tpu_custom_call.1} parent=11 // pred_check_branch
          %167 = sbr.rel (%p165) target = $region20
        $region19: #{tpu_custom_call.1} parent=11 // pred_region
          _
        $region20: #{tpu_custom_call.1} parent=11 // pred_fallthru
          _
        // Predicated region
        $region21: #{tpu_custom_call.1} parent=11 // pred_check
          %p168 = pneg %p119
        $region22: #{tpu_custom_call.1} parent=11 // pred_check_branch
          %170 = sbr.rel (%p168) target = $region24
        $region23: #{tpu_custom_call.1} parent=11 // pred_region
          _
        $region24: #{tpu_custom_call.1} parent=11 // pred_fallthru
          _
      $region12: #{tpu_custom_call.1} parent=5 // pred_fallthru
        _
      %p171 = scmp.lt.s32.totalorder %s16, 2
      // Predicated region
      $region25: #{tpu_custom_call.1} parent=5 // pred_check
        %p172 = pneg %p171
      $region26: #{tpu_custom_call.1} parent=5 // pred_check_branch
        %174 = sbr.rel (%p172) target = $region28
      $region27: #{tpu_custom_call.1} parent=5 // pred_region
        // Predicated region
        $region29: #{tpu_custom_call.1} parent=27 // pred_check
          %p175 = pneg %p50
        $region30: #{tpu_custom_call.1} parent=27 // pred_check_branch
          %177 = sbr.rel (%p175) target = $region32
        $region31: #{tpu_custom_call.1} parent=27 // pred_region
          %s178 = sand.u32 %s40, 1
          %s179 = scalar_lea.sflag [#allocation3], %s178
          %s180 = sand.u32 %s40, 1
          %s181 = smul.addr %s180, 8
          %s182 = scalar_lea.vmem [#allocation2], %s181
          %s183 = smul.u32 2, %s24
          %s185 = ssub.s32 128, 128
          %186 = vsyncadd %s179, %s185
          %s187 = smul.addr %s23, 2
          %s188 = sadd.s32 %s183, %s187
          %s189 = smul.addr %s188, 64
          %s190 = scalar_lea.hbm %s0, %s189
          %s192 = sshll.u32 %s182, 4
          %s193 = int_to_ptr.vmem [resolvable:$true] %s192
          %195 = dma.hbm_to_vmem [thread:$0]  %s190, 128, %s193, %s179
        $region32: #{tpu_custom_call.1} parent=27 // pred_fallthru
          _
      $region28: #{tpu_custom_call.1} parent=5 // pred_fallthru
        _
      %p196 = scmp.le.s32.totalorder 1, %s16
      %p197 = scmp.lt.s32.totalorder %s16, 3
      %p198 = pnand %p196, %p197
      %p199 = pneg %p198
      // Predicated region
      $region33: #{tpu_custom_call.1} parent=5 // pred_check
        _
      $region34: #{tpu_custom_call.1} parent=5 // pred_check_branch
        %201 = sbr.rel (%p198) target = $region36
      $region35: #{tpu_custom_call.1} parent=5 // pred_region
        %s202 = ssub.s32 %s16, 1
        %s203 = sand.u32 %s43, 1
        %s204 = scalar_lea.sflag [#allocation3], %s203
        %s205 = sand.u32 %s43, 1
        %s206 = smul.addr %s205, 8
        %s207 = scalar_lea.vmem [#allocation2], %s206
        // Predicated region
        $region37: #{tpu_custom_call.1} parent=35 // pred_check
          %p208 = pneg %p56
        $region38: #{tpu_custom_call.1} parent=35 // pred_check_branch
          %210 = sbr.rel (%p208) target = $region40
        $region39: #{tpu_custom_call.1} parent=35 // pred_region
          %211 = dma.done %s204, 128
        $region40: #{tpu_custom_call.1} parent=35 // pred_fallthru
          _
        %s212 = sand.u32 %s43, 1
        %s213 = scalar_lea.sflag [#allocation3], %s212
        %s214 = sand.u32 %s43, 1
        %s215 = smul.addr %s214, 8
        %s216 = scalar_lea.vmem [#allocation2], %s215
        %p217 = pneg %p56
        %p218 = pneg %p53
        %p219 = pneg %p77
        %p220 = pneg %p74
        %p221 = pneg %p98
        %p222 = pneg %p95
        %p223 = pneg %p119
        %p224 = pneg %p116
        %p225 = pneg %p147
        %p226 = pneg %p144
        %s227 = sand.u32 %s134, 1
        %s228 = scalar_lea.sflag [#allocation4], %s227
        %s229 = sand.u32 %s134, 1
        %s230 = smul.addr %s229, 8
        %s231 = scalar_lea.vmem [#allocation5], %s230
        %s232 = smul.u32 2, %s26
        %s233 = smul.u32 2, %s26
        %v234 = vld [vmem:[%s207] sm:$0xff]
        %v236 = vcombine.high %v234, %v234
        %vm238 = vcmask 1043456
        %v239 = vsel %vm238, %v234, 0.0
        %v240 = vrot.slane %v239, 4
        %v241 = vadd.f32 %v239, %v240
        %v242 = vrot.slane %v241, 2
        %v243 = vadd.f32 %v241, %v242
        %v244 = vrot.slane %v243, 1
        %v245 = vadd.f32 %v243, %v244
        %v246 = vsel %vm238, %v236, 0.0
        %v247 = vrot.slane %v246, 4
        %v248 = vadd.f32 %v246, %v247
        %v249 = vrot.slane %v248, 2
        %v250 = vadd.f32 %v248, %v249
        %v251 = vrot.slane %v250, 1
        %v252 = vadd.f32 %v250, %v251
        %v253 = vrcp.pop 4.0
        %v254 = vmul.f32 %v245, %v253
        %v255 = vmul.f32 %v252, %v253
        %v258 = vcombine.low %v254, %v255
        %v260 = vsub.f32 %v234, %v258
        %v261 = vmul.f32 %v260, %v260
        %v263 = vcombine.high %v261, %v261
        %v265 = vsel %vm238, %v261, 0.0
        %v266 = vrot.slane %v265, 4
        %v267 = vadd.f32 %v265, %v266
        %v268 = vrot.slane %v267, 2
        %v269 = vadd.f32 %v267, %v268
        %v270 = vrot.slane %v269, 1
        %v271 = vadd.f32 %v269, %v270
        %v272 = vsel %vm238, %v263, 0.0
        %v273 = vrot.slane %v272, 4
        %v274 = vadd.f32 %v272, %v273
        %v275 = vrot.slane %v274, 2
        %v276 = vadd.f32 %v274, %v275
        %v277 = vrot.slane %v276, 1
        %v278 = vadd.f32 %v276, %v277
        %v279 = vmul.f32 %v271, %v253
        %v280 = vmul.f32 %v278, %v253
        %v281 = vadd.f32 %v279, 1e-06
        %v282 = vadd.f32 %v280, 1e-06
        %v283 = vrsqrt.pop %v281
        %v284 = vrsqrt.pop %v282
        %v287 = vcombine.low %v283, %v284
        %v289 = vmul.f32 %v260, %v287
        %v290 = vld [vmem:[%s2] sm:$0xf]
        %292 = vset.pattern.permute.xlu0 0
        %293 = vperm.xlu0 %292, %v290
        %v294 = vpop.permute.xlu0 %293
        %v296 = vunpack.c.l.s4 839922192
        %v297 = vunpack.c.0.s8 %v296
        %v298 = vlaneseq
        %v299 = vshrl.u32 %v298, 7
        %v300 = vsub.s32 %v297, %v299
        %v301 = vrot.slane %v294, %v300
        %v303 = vmul.f32 %v289, %v301
        %v304 = vld [vmem:[%s3] sm:$0xf]
        %306 = vset.pattern.permute.xlu0 0
        %307 = vperm.xlu0 %306, %v304
        %v308 = vpop.permute.xlu0 %307
        %v310 = vunpack.c.l.s4 839922192
        %v311 = vunpack.c.0.s8 %v310
        %v312 = vlaneseq
        %v313 = vshrl.u32 %v312, 7
        %v314 = vsub.s32 %v311, %v313
        %v315 = vrot.slane %v308, %v314
        %v317 = vadd.f32 %v303, %v315
        %v318 = vld [vmem:[%s1] sm:$0xf]
        %v320 = vcombine.high %v317, %v317
        %vm321 = vcmask 31744
        %v323 = vsel %vm321, %v318, 0
        %v325 = vsel %vm238, %v317, 0
        %v327 = vsel %vm238, %v320, 0
        %329 = vmatprep.subr.mxu0 %v327
        %330 = vmatpush1.msra.mxu0 %v325
        %331 = vmatprep.subr.mxu0 0.0
        %332 = vmatpush1.msra.mxu0 0.0
        %333 = vmatprep.subr.mxu0 0.0
        %334 = vmatpush1.msra.mxu0 0.0
        %335 = vmatprep.subr.mxu0 0.0
        %336 = vmatpush1.msra.mxu0 0.0
        %337 = vmatprep.subr.mxu0 0.0
        %338 = vmatpush1.msra.mxu0 0.0
        %339 = vmatprep.subr.mxu0 0.0
        %340 = vmatpush1.msra.mxu0 0.0
        %341 = vmatprep.subr.mxu0 0.0
        %342 = vmatpush1.msra.mxu0 0.0
        %343 = vmatprep.subr.mxu0 0.0
        %344 = vmatpush1.msra.mxu0 0.0
        %345 = vmatprep.subr.mxu0 0.0
        %346 = vmatpush1.msra.mxu0 0.0
        %347 = vmatprep.subr.mxu0 0.0
        %348 = vmatpush1.msra.mxu0 0.0
        %349 = vmatprep.subr.mxu0 0.0
        %350 = vmatpush1.msra.mxu0 0.0
        %351 = vmatprep.subr.mxu0 0.0
        %352 = vmatpush1.msra.mxu0 0.0
        %353 = vmatprep.subr.mxu0 0.0
        %354 = vmatpush1.msra.mxu0 0.0
        %355 = vmatprep.subr.mxu0 0.0
        %356 = vmatpush1.msra.mxu0 0.0
        %357 = vmatprep.subr.mxu0 0.0
        %358 = vmatpush1.msra.mxu0 0.0
        %359 = vmatprep.subr.mxu0 0.0
        %360 = vmatpush1.msra.mxu0 0.0
        %361 = vmatprep.subr.mxu0 0.0
        %362 = vmatpush1.msra.mxu0 0.0
        %363 = vmatprep.subr.mxu0 0.0
        %364 = vmatpush1.msra.mxu0 0.0
        %365 = vmatprep.subr.mxu0 0.0
        %366 = vmatpush1.msra.mxu0 0.0
        %367 = vmatprep.subr.mxu0 0.0
        %368 = vmatpush1.msra.mxu0 0.0
        %369 = vmatprep.subr.mxu0 0.0
        %370 = vmatpush1.msra.mxu0 0.0
        %371 = vmatprep.subr.mxu0 0.0
        %372 = vmatpush1.msra.mxu0 0.0
        %373 = vmatprep.subr.mxu0 0.0
        %374 = vmatpush1.msra.mxu0 0.0
        %375 = vmatprep.subr.mxu0 0.0
        %376 = vmatpush1.msra.mxu0 0.0
        %377 = vmatprep.subr.mxu0 0.0
        %378 = vmatpush1.msra.mxu0 0.0
        %379 = vmatprep.subr.mxu0 0.0
        %380 = vmatpush1.msra.mxu0 0.0
        %381 = vmatprep.subr.mxu0 0.0
        %382 = vmatpush1.msra.mxu0 0.0
        %383 = vmatprep.subr.mxu0 0.0
        %384 = vmatpush1.msra.mxu0 0.0
        %385 = vmatprep.subr.mxu0 0.0
        %386 = vmatpush1.msra.mxu0 0.0
        %387 = vmatprep.subr.mxu0 0.0
        %388 = vmatpush1.msra.mxu0 0.0
        %389 = vmatprep.subr.mxu0 0.0
        %390 = vmatpush1.msra.mxu0 0.0
        %391 = vmatprep.subr.mxu0 0.0
        %392 = vmatpush1.msra.mxu0 0.0
        %393 = vmatprep.mubr.f32.mxu0 0.0
        %394 = vmatmul.mubr.f32.gmra.mrb[0].mxu0 %v323
        %v395 = vpop.f32.mrb[0].mxu0
        %v396 = vadd.f32 %v234, %v395
        %v397 = vpop.f32.mrb[0].mxu0
        %v398 = vadd.f32 %v236, %v397
        %399 = vdwg.mxu0
        %v402 = vcombine.low %v396, %v398
        %404 = vst [vmem:[%s231] sm:$0xff] %v402
        %s405 = sand.u32 %s134, 1
        %s406 = scalar_lea.sflag [#allocation4], %s405
        %s407 = sand.u32 %s134, 1
        %s408 = smul.addr %s407, 8
        %s409 = scalar_lea.vmem [#allocation5], %s408
        // Predicated region
        $region41: #{tpu_custom_call.1} parent=35 // pred_check
          %p410 = pneg %p144
        $region42: #{tpu_custom_call.1} parent=35 // pred_check_branch
          %412 = sbr.rel (%p410) target = $region44
        $region43: #{tpu_custom_call.1} parent=35 // pred_region
          %s413 = smul.u32 2, %s26
          %s415 = ssub.s32 128, 128
          %416 = vsyncadd %s406, %s415
          %s417 = smul.addr %s25, 2
          %s418 = sadd.s32 %s413, %s417
          %s419 = smul.addr %s418, 64
          %s420 = scalar_lea.hbm %s4, %s419
          %s422 = sshll.u32 %s409, 4
          %s423 = int_to_ptr.vmem [resolvable:$true] %s422
          %425 = dma.vmem_to_hbm [thread:$0]  %s423, 128, %s420, %s406
        $region44: #{tpu_custom_call.1} parent=35 // pred_fallthru
          _
      $region36: #{tpu_custom_call.1} parent=5 // pred_fallthru
        _
      %p426 = scmp.le.s32.totalorder 2, %s16
      // Predicated region
      $region45: #{tpu_custom_call.1} parent=5 // pred_check
        %p427 = pneg %p426
      $region46: #{tpu_custom_call.1} parent=5 // pred_check_branch
        %429 = sbr.rel (%p427) target = $region48
      $region47: #{tpu_custom_call.1} parent=5 // pred_region
        %s430 = ssub.s32 %s16, 2
        // Predicated region
        $region49: #{tpu_custom_call.1} parent=47 // pred_check
          %p431 = pneg %p150
        $region50: #{tpu_custom_call.1} parent=47 // pred_check_branch
          %433 = sbr.rel (%p431) target = $region52
        $region51: #{tpu_custom_call.1} parent=47 // pred_region
          %s434 = sand.u32 %s135, 1
          %s435 = scalar_lea.sflag [#allocation4], %s434
          %s436 = sand.u32 %s135, 1
          %s437 = smul.addr %s436, 8
          %s438 = scalar_lea.vmem [#allocation5], %s437
          %439 = dma.done %s435, 128
        $region52: #{tpu_custom_call.1} parent=47 // pred_fallthru
          _
      $region48: #{tpu_custom_call.1} parent=5 // pred_fallthru
        _
    $region6: #{tpu_custom_call.1} parent=1 // loop_footer
      %s20 = sadd.s32 1, %s16
    $region7: #{tpu_custom_call.1} parent=1 // loop_footer_branch
      %15 = sbr.rel target = $region3
    $region8: #{tpu_custom_call.1} parent=1 // loop_exit
      _
    %440 = vsyncpa [#allocation3], 1
    %s441 = scalar_lea.sflag [#allocation3], 1
    %442 = vsyncpa %s441, 1
    %443 = vsyncpa [#allocation4], 1
    %s444 = scalar_lea.sflag [#allocation4], 1
    %445 = vsyncpa %s444, 1

// kernel: tpu_custom_call.1
$region0: #{tpu_custom_call.1}
  #allocation0 [shape = 'u32[]', space=smem, size = 0x4, offset = 0x4, fixed_abs, tag = 'smem constant byte address 0x4 - core index']
  #allocation1 [shape = 'u32[144,128]{1,0:T(1,128)}', space=vmem, size = 0x12000, scoped, tag = 'internal scratch']
  %s0 = inlined_call_operand.hbm [shape: f32[2,4,256], index: 0, kind: input, shape index: {}]
  %s1 = inlined_call_operand.vmem [shape: f32[4,4], index: 1, kind: input, shape index: {}]
  %s2 = inlined_call_operand.vmem [shape: f32[4,1], index: 2, kind: input, shape index: {}]
  %s3 = inlined_call_operand.vmem [shape: f32[4,1], index: 3, kind: input, shape index: {}]
  %s4 = inlined_call_operand.hbm [shape: f32[2,4,256], index: 4, kind: output, shape index: {}]
  %s5 = sld [smem:[#allocation0]]
  $region53: #{tpu_custom_call.1} parent=0
    _
  %s7 = ssub.s32 1, %s5
  %s8 = scalar_select 0, %s7, %s5
  $region1: #{tpu_custom_call.1} parent=0
    #allocation2 [shape = 'u8[8192]{0}', space=vmem, size = 0x2000, scoped, tag = 'input window, operand 0']
    #allocation3 [shape = 's32[2]{0}', space=sflag, size = 0x8, scoped, tag = 'scoped memory for tpu_custom_call.1']
    #allocation4 [shape = 's32[2]{0}', space=sflag, size = 0x8, scoped, tag = 'scoped memory for tpu_custom_call.1']
    #allocation5 [shape = 'u8[8192]{0}', space=vmem, size = 0x2000, scoped, tag = 'output window, operand 0']
    %9 = vsyncpa [#allocation3], 0
    %s10 = scalar_lea.sflag [#allocation3], 1
    %11 = vsyncpa %s10, 0
    %12 = vsyncpa [#allocation4], 0
    %s13 = scalar_lea.sflag [#allocation4], 1
    %14 = vsyncpa %s13, 0
    loop: start=0, step=1, limit=4
    $region2: #{tpu_custom_call.1} parent=1 // loop_pre_header
      _
    $region3: #{tpu_custom_call.1} parent=1 // loop_header
      %s16 = sphi 0, %s20
      %p17 = scmp.ge.s32.totalorder %s16, 4
      %s23 = sphi 0, %s35
      %s24 = sphi 0, %s31
      %s25 = sphi 0, %s23
      %s26 = sphi 0, %s24
      %s27 = sphi 0, %s25
      %s28 = sphi 0, %s26
      %s40 = sphi 0, %s42
      %s43 = sphi 0, %s40
      %s44 = sphi 0, %s43
      %s60 = sphi 0, %s44
      %s64 = sphi 0, %s64
      %s66 = sphi 0, %s64
      %s67 = sphi 0, %s66
      %s81 = sphi 0, %s67
      %s85 = sphi 0, %s85
      %s87 = sphi 0, %s85
      %s88 = sphi 0, %s87
      %s102 = sphi 0, %s88
      %s106 = sphi 0, %s106
      %s108 = sphi 0, %s106
      %s109 = sphi 0, %s108
      %s123 = sphi 0, %s109
      %s131 = sphi 0, %s133
      %s134 = sphi 0, %s131
      %s135 = sphi 0, %s134
      %s151 = sphi 0, %s135
    $region4: #{tpu_custom_call.1} parent=1 // loop_header_branch
      %19 = sbr.rel (%p17) target = $region8
    $region5: #{tpu_custom_call.1} parent=1 // loop_body
      %s21 = ssub.s32 %s16, 1
      %s22 = ssub.s32 %s16, 2
      %s29 = sadd.s32 1, %s24
      %p30 = scmp.ge.s32.totalorder %s29, 1
      %s31 = scalar_select %p30, 0, %s29
      %s32 = sadd.s32 1, %s23
      %s33 = scalar_select %p30, %s32, %s23
      %p34 = scmp.ge.s32.totalorder %s33, 2
      %s35 = scalar_select %p34, 0, %s33
      %s36 = ssub.s32 %s23, %s35
      %s37 = ssub.s32 %s24, %s31
      %s38 = sor.u32 %s36, %s37
      %p39 = scmp.eq.s32.totalorder %s38, 0
      %s41 = sadd.s32 %s40, 1
      %s42 = scalar_select %p39, %s40, %s41
      %p45 = pneg %p39
      %p46 = scmp.eq.s32.totalorder %s16, 1
      %p47 = por %p45, %p46
      %p48 = scmp.ne.s32.totalorder %s40, %s43
      %p49 = scmp.eq.s32.totalorder %s16, 0
      %p50 = por %p48, %p49
      %p51 = scmp.ne.s32.totalorder %s40, %s43
      %p52 = scmp.eq.s32.totalorder %s21, 1
      %p53 = por %p51, %p52
      %p54 = scmp.ne.s32.totalorder %s43, %s44
      %p55 = scmp.eq.s32.totalorder %s21, 0
      %p56 = por %p54, %p55
      %p57 = scmp.ne.s32.totalorder %s43, %s44
      %p58 = scmp.eq.s32.totalorder %s22, 1
      %p59 = por %p57, %p58
      %p61 = scmp.ne.s32.totalorder %s44, %s60
      %p62 = scmp.eq.s32.totalorder %s22, 0
      %p63 = por %p61, %p62
      %s65 = sadd.s32 %s64, 1
      %p68 = scmp.eq.s32.totalorder %s16, 1
      %p69 = scmp.ne.s32.totalorder %s64, %s66
      %p70 = scmp.eq.s32.totalorder %s16, 0
      %p71 = por %p69, %p70
      %p72 = scmp.ne.s32.totalorder %s64, %s66
      %p73 = scmp.eq.s32.totalorder %s21, 1
      %p74 = por %p72, %p73
      %p75 = scmp.ne.s32.totalorder %s66, %s67
      %p76 = scmp.eq.s32.totalorder %s21, 0
      %p77 = por %p75, %p76
      %p78 = scmp.ne.s32.totalorder %s66, %s67
      %p79 = scmp.eq.s32.totalorder %s22, 1
      %p80 = por %p78, %p79
      %p82 = scmp.ne.s32.totalorder %s67, %s81
      %p83 = scmp.eq.s32.totalorder %s22, 0
      %p84 = por %p82, %p83
      %s86 = sadd.s32 %s85, 1
      %p89 = scmp.eq.s32.totalorder %s16, 1
      %p90 = scmp.ne.s32.totalorder %s85, %s87
      %p91 = scmp.eq.s32.totalorder %s16, 0
      %p92 = por %p90, %p91
      %p93 = scmp.ne.s32.totalorder %s85, %s87
      %p94 = scmp.eq.s32.totalorder %s21, 1
      %p95 = por %p93, %p94
      %p96 = scmp.ne.s32.totalorder %s87, %s88
      %p97 = scmp.eq.s32.totalorder %s21, 0
      %p98 = por %p96, %p97
      %p99 = scmp.ne.s32.totalorder %s87, %s88
      %p100 = scmp.eq.s32.totalorder %s22, 1
      %p101 = por %p99, %p100
      %p103 = scmp.ne.s32.totalorder %s88, %s102
      %p104 = scmp.eq.s32.totalorder %s22, 0
      %p105 = por %p103, %p104
      %s107 = sadd.s32 %s106, 1
      %p110 = scmp.eq.s32.totalorder %s16, 1
      %p111 = scmp.ne.s32.totalorder %s106, %s108
      %p112 = scmp.eq.s32.totalorder %s16, 0
      %p113 = por %p111, %p112
      %p114 = scmp.ne.s32.totalorder %s106, %s108
      %p115 = scmp.eq.s32.totalorder %s21, 1
      %p116 = por %p114, %p115
      %p117 = scmp.ne.s32.totalorder %s108, %s109
      %p118 = scmp.eq.s32.totalorder %s21, 0
      %p119 = por %p117, %p118
      %p120 = scmp.ne.s32.totalorder %s108, %s109
      %p121 = scmp.eq.s32.totalorder %s22, 1
      %p122 = por %p120, %p121
      %p124 = scmp.ne.s32.totalorder %s109, %s123
      %p125 = scmp.eq.s32.totalorder %s22, 0
      %p126 = por %p124, %p125
      %s127 = ssub.s32 %s23, %s35
      %s128 = ssub.s32 %s24, %s31
      %s129 = sor.u32 %s127, %s128
      %p130 = scmp.eq.s32.totalorder %s129, 0
      %s132 = sadd.s32 %s131, 1
      %s133 = scalar_select %p130, %s131, %s132
      %p136 = pneg %p130
      %p137 = scmp.eq.s32.totalorder %s16, 1
      %p138 = por %p136, %p137
      %p139 = scmp.ne.s32.totalorder %s131, %s134
      %p140 = scmp.eq.s32.totalorder %s16, 0
      %p141 = por %p139, %p140
      %p142 = scmp.ne.s32.totalorder %s131, %s134
      %p143 = scmp.eq.s32.totalorder %s21, 1
      %p144 = por %p142, %p143
      %p145 = scmp.ne.s32.totalorder %s134, %s135
      %p146 = scmp.eq.s32.totalorder %s21, 0
      %p147 = por %p145, %p146
      %p148 = scmp.ne.s32.totalorder %s134, %s135
      %p149 = scmp.eq.s32.totalorder %s22, 1
      %p150 = por %p148, %p149
      %p152 = scmp.ne.s32.totalorder %s135, %s151
      %p153 = scmp.eq.s32.totalorder %s22, 0
      %p154 = por %p152, %p153
      %p155 = scmp.le.s32.totalorder 1, %s16
      %p156 = scmp.lt.s32.totalorder %s16, 3
      %p157 = pnand %p155, %p156
      %p158 = pneg %p157
      // Predicated region
      $region9: #{tpu_custom_call.1} parent=5 // pred_check
        _
      $region10: #{tpu_custom_call.1} parent=5 // pred_check_branch
        %160 = sbr.rel (%p157) target = $region12
      $region11: #{tpu_custom_call.1} parent=5 // pred_region
        %s161 = ssub.s32 %s16, 1
        // Predicated region
        $region13: #{tpu_custom_call.1} parent=11 // pred_check
          %p162 = pneg %p77
        $region14: #{tpu_custom_call.1} parent=11 // pred_check_branch
          %164 = sbr.rel (%p162) target = $region16
        $region15: #{tpu_custom_call.1} parent=11 // pred_region
          _
        $region16: #{tpu_custom_call.1} parent=11 // pred_fallthru
          _
        // Predicated region
        $region17: #{tpu_custom_call.1} parent=11 // pred_check
          %p165 = pneg %p98
        $region18: #{tpu_custom_call.1} parent=11 // pred_check_branch
          %167 = sbr.rel (%p165) target = $region20
        $region19: #{tpu_custom_call.1} parent=11 // pred_region
          _
        $region20: #{tpu_custom_call.1} parent=11 // pred_fallthru
          _
        // Predicated region
        $region21: #{tpu_custom_call.1} parent=11 // pred_check
          %p168 = pneg %p119
        $region22: #{tpu_custom_call.1} parent=11 // pred_check_branch
          %170 = sbr.rel (%p168) target = $region24
        $region23: #{tpu_custom_call.1} parent=11 // pred_region
          _
        $region24: #{tpu_custom_call.1} parent=11 // pred_fallthru
          _
      $region12: #{tpu_custom_call.1} parent=5 // pred_fallthru
        _
      %p171 = scmp.lt.s32.totalorder %s16, 2
      // Predicated region
      $region25: #{tpu_custom_call.1} parent=5 // pred_check
        %p172 = pneg %p171
      $region26: #{tpu_custom_call.1} parent=5 // pred_check_branch
        %174 = sbr.rel (%p172) target = $region28
      $region27: #{tpu_custom_call.1} parent=5 // pred_region
        // Predicated region
        $region29: #{tpu_custom_call.1} parent=27 // pred_check
          %p175 = pneg %p50
        $region30: #{tpu_custom_call.1} parent=27 // pred_check_branch
          %177 = sbr.rel (%p175) target = $region32
        $region31: #{tpu_custom_call.1} parent=27 // pred_region
          %s178 = sand.u32 %s40, 1
          %s179 = scalar_lea.sflag [#allocation3], %s178
          %s180 = sand.u32 %s40, 1
          %s181 = smul.addr %s180, 8
          %s182 = scalar_lea.vmem [#allocation2], %s181
          %s183 = smul.u32 2, %s24
          %s185 = ssub.s32 128, 128
          %186 = vsyncadd %s179, %s185
          %s187 = smul.addr %s23, 2
          %s188 = sadd.s32 %s183, %s187
          %s189 = smul.addr %s188, 64
          %s190 = scalar_lea.hbm %s0, %s189
          %s192 = sshll.u32 %s182, 4
          %s193 = int_to_ptr.vmem [resolvable:$true] %s192
          %195 = dma.hbm_to_vmem [thread:$0]  %s190, 128, %s193, %s179
        $region32: #{tpu_custom_call.1} parent=27 // pred_fallthru
          _
      $region28: #{tpu_custom_call.1} parent=5 // pred_fallthru
        _
      %p196 = scmp.le.s32.totalorder 1, %s16
      %p197 = scmp.lt.s32.totalorder %s16, 3
      %p198 = pnand %p196, %p197
      %p199 = pneg %p198
      // Predicated region
      $region33: #{tpu_custom_call.1} parent=5 // pred_check
        _
      $region34: #{tpu_custom_call.1} parent=5 // pred_check_branch
        %201 = sbr.rel (%p198) target = $region36
      $region35: #{tpu_custom_call.1} parent=5 // pred_region
        %s202 = ssub.s32 %s16, 1
        %s203 = sand.u32 %s43, 1
        %s204 = scalar_lea.sflag [#allocation3], %s203
        %s205 = sand.u32 %s43, 1
        %s206 = smul.addr %s205, 8
        %s207 = scalar_lea.vmem [#allocation2], %s206
        // Predicated region
        $region37: #{tpu_custom_call.1} parent=35 // pred_check
          %p208 = pneg %p56
        $region38: #{tpu_custom_call.1} parent=35 // pred_check_branch
          %210 = sbr.rel (%p208) target = $region40
        $region39: #{tpu_custom_call.1} parent=35 // pred_region
          %211 = dma.done %s204, 128
        $region40: #{tpu_custom_call.1} parent=35 // pred_fallthru
          _
        %s212 = sand.u32 %s43, 1
        %s213 = scalar_lea.sflag [#allocation3], %s212
        %s214 = sand.u32 %s43, 1
        %s215 = smul.addr %s214, 8
        %s216 = scalar_lea.vmem [#allocation2], %s215
        %p217 = pneg %p56
        %p218 = pneg %p53
        %p219 = pneg %p77
        %p220 = pneg %p74
        %p221 = pneg %p98
        %p222 = pneg %p95
        %p223 = pneg %p119
        %p224 = pneg %p116
        %p225 = pneg %p147
        %p226 = pneg %p144
        %s227 = sand.u32 %s134, 1
        %s228 = scalar_lea.sflag [#allocation4], %s227
        %s229 = sand.u32 %s134, 1
        %s230 = smul.addr %s229, 8
        %s231 = scalar_lea.vmem [#allocation5], %s230
        %s232 = smul.u32 2, %s26
        %s233 = smul.u32 2, %s26
        %v234 = vld [vmem:[%s207] sm:$0xff]
        %v236 = vcombine.high %v234, %v234
        %vm238 = vcmask 1043456
        %v239 = vsel %vm238, %v234, 0.0
        %v240 = vrot.slane %v239, 4
        %v241 = vadd.f32 %v239, %v240
        %v242 = vrot.slane %v241, 2
        %v243 = vadd.f32 %v241, %v242
        %v244 = vrot.slane %v243, 1
        %v245 = vadd.f32 %v243, %v244
        %v246 = vsel %vm238, %v236, 0.0
        %v247 = vrot.slane %v246, 4
        %v248 = vadd.f32 %v246, %v247
        %v249 = vrot.slane %v248, 2
        %v250 = vadd.f32 %v248, %v249
        %v251 = vrot.slane %v250, 1
        %v252 = vadd.f32 %v250, %v251
        %v253 = vrcp.pop 4.0
        %v254 = vmul.f32 %v245, %v253
        %v255 = vmul.f32 %v252, %v253
        %v258 = vcombine.low %v254, %v255
        %v260 = vsub.f32 %v234, %v258
        %v261 = vmul.f32 %v260, %v260
        %v263 = vcombine.high %v261, %v261
        %v265 = vsel %vm238, %v261, 0.0
        %v266 = vrot.slane %v265, 4
        %v267 = vadd.f32 %v265, %v266
        %v268 = vrot.slane %v267, 2
        %v269 = vadd.f32 %v267, %v268
        %v270 = vrot.slane %v269, 1
        %v271 = vadd.f32 %v269, %v270
        %v272 = vsel %vm238, %v263, 0.0
        %v273 = vrot.slane %v272, 4
        %v274 = vadd.f32 %v272, %v273
        %v275 = vrot.slane %v274, 2
        %v276 = vadd.f32 %v274, %v275
        %v277 = vrot.slane %v276, 1
        %v278 = vadd.f32 %v276, %v277
        %v279 = vmul.f32 %v271, %v253
        %v280 = vmul.f32 %v278, %v253
        %v281 = vadd.f32 %v279, 1e-06
        %v282 = vadd.f32 %v280, 1e-06
        %v283 = vrsqrt.pop %v281
        %v284 = vrsqrt.pop %v282
        %v287 = vcombine.low %v283, %v284
        %v289 = vmul.f32 %v260, %v287
        %v290 = vld [vmem:[%s2] sm:$0xf]
        %292 = vset.pattern.permute.xlu0 0
        %293 = vperm.xlu0 %292, %v290
        %v294 = vpop.permute.xlu0 %293
        %v296 = vunpack.c.l.s4 839922192
        %v297 = vunpack.c.0.s8 %v296
        %v298 = vlaneseq
        %v299 = vshrl.u32 %v298, 7
        %v300 = vsub.s32 %v297, %v299
        %v301 = vrot.slane %v294, %v300
        %v303 = vmul.f32 %v289, %v301
        %v304 = vld [vmem:[%s3] sm:$0xf]
        %306 = vset.pattern.permute.xlu0 0
        %307 = vperm.xlu0 %306, %v304
        %v308 = vpop.permute.xlu0 %307
        %v310 = vunpack.c.l.s4 839922192
        %v311 = vunpack.c.0.s8 %v310
        %v312 = vlaneseq
        %v313 = vshrl.u32 %v312, 7
        %v314 = vsub.s32 %v311, %v313
        %v315 = vrot.slane %v308, %v314
        %v317 = vadd.f32 %v303, %v315
        %v318 = vld [vmem:[%s1] sm:$0xf]
        %v320 = vcombine.high %v317, %v317
        %vm321 = vcmask 31744
        %v323 = vsel %vm321, %v318, 0
        %v325 = vsel %vm238, %v317, 0
        %v327 = vsel %vm238, %v320, 0
        %329 = vmatprep.subr.mxu0 %v327
        %330 = vmatpush1.msra.mxu0 %v325
        %331 = vmatprep.subr.mxu0 0.0
        %332 = vmatpush1.msra.mxu0 0.0
        %333 = vmatprep.subr.mxu0 0.0
        %334 = vmatpush1.msra.mxu0 0.0
        %335 = vmatprep.subr.mxu0 0.0
        %336 = vmatpush1.msra.mxu0 0.0
        %337 = vmatprep.subr.mxu0 0.0
        %338 = vmatpush1.msra.mxu0 0.0
        %339 = vmatprep.subr.mxu0 0.0
        %340 = vmatpush1.msra.mxu0 0.0
        %341 = vmatprep.subr.mxu0 0.0
        %342 = vmatpush1.msra.mxu0 0.0
        %343 = vmatprep.subr.mxu0 0.0
        %344 = vmatpush1.msra.mxu0 0.0
        %345 = vmatprep.subr.mxu0 0.0
        %346 = vmatpush1.msra.mxu0 0.0
        %347 = vmatprep.subr.mxu0 0.0
        %348 = vmatpush1.msra.mxu0 0.0
        %349 = vmatprep.subr.mxu0 0.0
        %350 = vmatpush1.msra.mxu0 0.0
        %351 = vmatprep.subr.mxu0 0.0
        %352 = vmatpush1.msra.mxu0 0.0
        %353 = vmatprep.subr.mxu0 0.0
        %354 = vmatpush1.msra.mxu0 0.0
        %355 = vmatprep.subr.mxu0 0.0
        %356 = vmatpush1.msra.mxu0 0.0
        %357 = vmatprep.subr.mxu0 0.0
        %358 = vmatpush1.msra.mxu0 0.0
        %359 = vmatprep.subr.mxu0 0.0
        %360 = vmatpush1.msra.mxu0 0.0
        %361 = vmatprep.subr.mxu0 0.0
        %362 = vmatpush1.msra.mxu0 0.0
        %363 = vmatprep.subr.mxu0 0.0
        %364 = vmatpush1.msra.mxu0 0.0
        %365 = vmatprep.subr.mxu0 0.0
        %366 = vmatpush1.msra.mxu0 0.0
        %367 = vmatprep.subr.mxu0 0.0
        %368 = vmatpush1.msra.mxu0 0.0
        %369 = vmatprep.subr.mxu0 0.0
        %370 = vmatpush1.msra.mxu0 0.0
        %371 = vmatprep.subr.mxu0 0.0
        %372 = vmatpush1.msra.mxu0 0.0
        %373 = vmatprep.subr.mxu0 0.0
        %374 = vmatpush1.msra.mxu0 0.0
        %375 = vmatprep.subr.mxu0 0.0
        %376 = vmatpush1.msra.mxu0 0.0
        %377 = vmatprep.subr.mxu0 0.0
        %378 = vmatpush1.msra.mxu0 0.0
        %379 = vmatprep.subr.mxu0 0.0
        %380 = vmatpush1.msra.mxu0 0.0
        %381 = vmatprep.subr.mxu0 0.0
        %382 = vmatpush1.msra.mxu0 0.0
        %383 = vmatprep.subr.mxu0 0.0
        %384 = vmatpush1.msra.mxu0 0.0
        %385 = vmatprep.subr.mxu0 0.0
        %386 = vmatpush1.msra.mxu0 0.0
        %387 = vmatprep.subr.mxu0 0.0
        %388 = vmatpush1.msra.mxu0 0.0
        %389 = vmatprep.subr.mxu0 0.0
        %390 = vmatpush1.msra.mxu0 0.0
        %391 = vmatprep.subr.mxu0 0.0
        %392 = vmatpush1.msra.mxu0 0.0
        %393 = vmatprep.mubr.f32.mxu0 0.0
        %394 = vmatmul.mubr.f32.gmra.mrb[0].mxu0 %v323
        %v395 = vpop.f32.mrb[0].mxu0
        %v396 = vadd.f32 %v234, %v395
        %v397 = vpop.f32.mrb[0].mxu0
        %v398 = vadd.f32 %v236, %v397
        %399 = vdwg.mxu0
        %v402 = vcombine.low %v396, %v398
        %404 = vst [vmem:[%s231] sm:$0xff] %v402
        %s405 = sand.u32 %s134, 1
        %s406 = scalar_lea.sflag [#allocation4], %s405
        %s407 = sand.u32 %s134, 1
        %s408 = smul.addr %s407, 8
        %s409 = scalar_lea.vmem [#allocation5], %s408
        // Predicated region
        $region41: #{tpu_custom_call.1} parent=35 // pred_check
          %p410 = pneg %p144
        $region42: #{tpu_custom_call.1} parent=35 // pred_check_branch
          %412 = sbr.rel (%p410) target = $region44
        $region43: #{tpu_custom_call.1} parent=35 // pred_region
          %s413 = smul.u32 2, %s26
          %s415 = ssub.s32 128, 128
          %416 = vsyncadd %s406, %s415
          %s417 = smul.addr %s25, 2
          %s418 = sadd.s32 %s413, %s417
          %s419 = smul.addr %s418, 64
          %s420 = scalar_lea.hbm %s4, %s419
          %s422 = sshll.u32 %s409, 4
          %s423 = int_to_ptr.vmem [resolvable:$true] %s422
          %425 = dma.vmem_to_hbm [thread:$0]  %s423, 128, %s420, %s406
        $region44: #{tpu_custom_call.1} parent=35 // pred_fallthru
          _
      $region36: #{tpu_custom_call.1} parent=5 // pred_fallthru
        _
      %p426 = scmp.le.s32.totalorder 2, %s16
      // Predicated region
      $region45: #{tpu_custom_call.1} parent=5 // pred_check
        %p427 = pneg %p426
      $region46: #{tpu_custom_call.1} parent=5 // pred_check_branch
        %429 = sbr.rel (%p427) target = $region48
      $region47: #{tpu_custom_call.1} parent=5 // pred_region
        %s430 = ssub.s32 %s16, 2
        // Predicated region
        $region49: #{tpu_custom_call.1} parent=47 // pred_check
          %p431 = pneg %p150
        $region50: #{tpu_custom_call.1} parent=47 // pred_check_branch
          %433 = sbr.rel (%p431) target = $region52
        $region51: #{tpu_custom_call.1} parent=47 // pred_region
          %s434 = sand.u32 %s135, 1
          %s435 = scalar_lea.sflag [#allocation4], %s434
          %s436 = sand.u32 %s135, 1
          %s437 = smul.addr %s436, 8
          %s438 = scalar_lea.vmem [#allocation5], %s437
          %439 = dma.done %s435, 128
        $region52: #{tpu_custom_call.1} parent=47 // pred_fallthru
          _
      $region48: #{tpu_custom_call.1} parent=5 // pred_fallthru
        _
    $region6: #{tpu_custom_call.1} parent=1 // loop_footer
      %s20 = sadd.s32 1, %s16
    $region7: #{tpu_custom_call.1} parent=1 // loop_footer_branch
      %15 = sbr.rel target = $region3
    $region8: #{tpu_custom_call.1} parent=1 // loop_exit
      _
    %440 = vsyncpa [#allocation3], 1
    %s441 = scalar_lea.sflag [#allocation3], 1
    %442 = vsyncpa %s441, 1
    %443 = vsyncpa [#allocation4], 1
    %s444 = scalar_lea.sflag [#allocation4], 1
    %445 = vsyncpa %s444, 1

</llo_original>
